<compile_context>
chip_gen: v7x
topology: tpu7x:2x2x1
jax: 0.10.0
libtpu: 0.0.40
codegen_flags: <defaults>
</compile_context>

<pallas_src>
import jax
import jax.numpy as jnp
from jax.experimental import pallas as pl
from jax.experimental.pallas import tpu as pltpu

IMAGENET_MEAN = jnp.array([0.485, 0.456, 0.406], jnp.float32)
IMAGENET_STD = jnp.array([0.229, 0.224, 0.225], jnp.float32)

CIN, COUT, K = 6, 3, 3  # adapter: Conv2d(6 -> 3, kernel 3, stride 1, padding 1)


def _fused_kernel(x_ref, pw_ref, gsh_ref, h1_ref, h2_ref, o_ref):
    # x_ref  : (TB, CIN, H*W)   VMEM  flattened images of this group
    # pw_ref : (COUT, CIN, H*W) VMEM  folded conv/GAP/normalization pixel weights
    # gsh_ref: (COUT,)          SMEM  folded conv-bias + ImageNet mean/std shift
    # h*_ref : (8,)             SMEM  stand-in head: [w row-major (3,2), b (2)]
    # o_ref  : (1, TB, 2)       VMEM  class-1 probability per image per model
    xb = x_ref[...]

    # ---- adapter conv + GAP + normalization, reordered as 3 weighted reductions ----
    g = []
    for co in range(COUT):
        t = jnp.sum(xb * pw_ref[co], axis=-1)                        # (TB, CIN)
        g.append(jnp.sum(t, axis=-1, keepdims=True) + gsh_ref[co])   # (TB, 1)

    # TODO(synk): convnext_base / RepLKNet-31B are full pretrained backbones with
    # no compact Pallas equivalent; each branch is stood in by GAP + Linear(3->2).
    def head(h_ref):
        l0 = g[0] * h_ref[0] + g[1] * h_ref[2] + g[2] * h_ref[4] + h_ref[6]
        l1 = g[0] * h_ref[1] + g[1] * h_ref[3] + g[2] * h_ref[5] + h_ref[7]
        m = jnp.maximum(l0, l1)
        e0 = jnp.exp(l0 - m)
        e1 = jnp.exp(l1 - m)
        return e1 / (e0 + e1)                                        # (TB, 1)

    o_ref[0] = jnp.concatenate([head(h1_ref), head(h2_ref)], axis=-1)  # (TB, 2)


def _pick_tb(bn, per_image_bytes, target_block_bytes=6 << 20):
    """Images per grid step: target a multi-MiB input block, cap at BN."""
    tb = int(min(bn, max(1, target_block_bytes // max(per_image_bytes, 1))))
    if tb == bn and bn >= 16:
        # Keep >=2 grid steps so the ("parallel",) axis can shard across the
        # two v7x TensorCores (neutral on v5e/v6e).
        tb = (bn + 1) // 2
    return tb


def final_model_forward(x, params):
    """x: (B, N, 6, H, W) float32  ->  (B,) ensemble score."""
    B, N, C, H, W = x.shape
    assert C == CIN
    BN = B * N
    HW = H * W

    TB = _pick_tb(BN, CIN * HW * 4)
    G = (BN + TB - 1) // TB

    # Only wrapper-side data movement: a free contiguous reshape.
    xf = x.reshape(BN, CIN, HW).astype(jnp.float32)

    # Fold conv weights + border-tap validity (replaces zero padding) + 1/(H*W)
    # GAP factor + ImageNet std scale into per-pixel weights (parameter-only work).
    w = params["adapter_w"].astype(jnp.float32)                       # (3, 6, 3, 3)
    taps = jnp.arange(K)[:, None]
    ys = jnp.arange(H)[None, :]
    xs = jnp.arange(W)[None, :]
    row_ok = ((ys + 1 - taps >= 0) & (ys + 1 - taps < H)).astype(jnp.float32)  # (3, H)
    col_ok = ((xs + 1 - taps >= 0) & (xs + 1 - taps < W)).astype(jnp.float32)  # (3, W)
    pw = jnp.einsum("oikl,kh,lw->oihw", w, row_ok, col_ok)            # (3, 6, H, W)
    pw = pw * (1.0 / (HW * IMAGENET_STD))[:, None, None, None]
    pw = pw.reshape(COUT, CIN, HW)

    # Folded conv bias + ImageNet mean/std shift.
    gshift = ((params["adapter_b"].astype(jnp.float32) - IMAGENET_MEAN)
              / IMAGENET_STD)                                          # (3,)
    h1 = jnp.concatenate([params["head1_w"].reshape(-1),
                          params["head1_b"].reshape(-1)]).astype(jnp.float32)
    h2 = jnp.concatenate([params["head2_w"].reshape(-1),
                          params["head2_b"].reshape(-1)]).astype(jnp.float32)

    cost = pl.CostEstimate(
        flops=2 * BN * CIN * HW * COUT + 40 * BN,
        transcendentals=4 * BN,
        bytes_accessed=(BN * CIN * HW + COUT * CIN * HW + G * TB * 2) * 4)

    probs = pl.pallas_call(
        _fused_kernel,
        out_shape=jax.ShapeDtypeStruct((G, TB, 2), jnp.float32),
        grid_spec=pl.GridSpec(
            grid=(G,),
            in_specs=[
                pl.BlockSpec((TB, CIN, HW), lambda g: (g, 0, 0)),
                pl.BlockSpec((COUT, CIN, HW), lambda g: (0, 0, 0)),
                pl.BlockSpec(memory_space=pltpu.MemorySpace.SMEM),
                pl.BlockSpec(memory_space=pltpu.MemorySpace.SMEM),
                pl.BlockSpec(memory_space=pltpu.MemorySpace.SMEM),
            ],
            out_specs=pl.BlockSpec((1, TB, 2), lambda g: (g, 0, 0)),
        ),
        compiler_params=pltpu.CompilerParams(
            dimension_semantics=("parallel",),
            vmem_limit_bytes=32 * 1024 * 1024),
        cost_estimate=cost,
    )(xf, pw, gshift, h1, h2)

    # Glue: drop padded rows of the last group, view(B, N).mean(-1) per model,
    # stack, mean over the two models -> (B,)
    p = probs.reshape(G * TB, 2)[:BN]
    p1 = p[:, 0].reshape(B, N).mean(axis=-1)
    p2 = p[:, 1].reshape(B, N).mean(axis=-1)
    return jnp.stack([p1, p2], axis=-1).mean(axis=-1)


def _reference(x, params):
    """Pure-JAX reference with the same stand-in backbones."""
    B, N, C, H, W = x.shape
    xf = x.reshape(B * N, C, H, W).astype(jnp.float32)
    conv = jax.lax.conv_general_dilated(
        xf, params["adapter_w"], window_strides=(1, 1),
        padding=((1, 1), (1, 1)), dimension_numbers=("NCHW", "OIHW", "NCHW"),
        precision=jax.lax.Precision.HIGHEST)
    conv = conv + params["adapter_b"][None, :, None, None]
    feat = (conv - IMAGENET_MEAN[None, :, None, None]) / IMAGENET_STD[None, :, None, None]
    g = feat.mean(axis=(2, 3))                                        # (BN, 3)

    def head(wh, bh):
        logits = jnp.einsum("bc,cd->bd", g, wh,
                            precision=jax.lax.Precision.HIGHEST) + bh
        return jax.nn.softmax(logits, axis=-1)[:, 1]

    p1 = head(params["head1_w"], params["head1_b"]).reshape(B, N).mean(-1)
    p2 = head(params["head2_w"], params["head2_b"]).reshape(B, N).mean(-1)
    return jnp.stack([p1, p2], axis=-1).mean(axis=-1)


if __name__ == "__main__":
    key = jax.random.PRNGKey(0)
    kx, kw, kb, kh1, kb1, kh2, kb2 = jax.random.split(key, 7)

    B, N, H, W = 2, 2, 16, 16
    x = jax.random.normal(kx, (B, N, CIN, H, W), jnp.float32)

    params = {
        "adapter_w": jax.random.normal(kw, (COUT, CIN, K, K), jnp.float32) * 0.1,
        "adapter_b": jax.random.normal(kb, (COUT,), jnp.float32) * 0.1,
        "head1_w": jax.random.normal(kh1, (COUT, 2), jnp.float32) * 0.5,
        "head1_b": jax.random.normal(kb1, (2,), jnp.float32) * 0.1,
        "head2_w": jax.random.normal(kh2, (COUT, 2), jnp.float32) * 0.5,
        "head2_b": jax.random.normal(kb2, (2,), jnp.float32) * 0.1,
    }

    out = final_model_forward(x, params)
    jax.block_until_ready(out)
    assert out.shape == (B,)

    ref = _reference(x, params)
    assert jnp.allclose(out, ref, atol=1e-3, rtol=1e-3), (out, ref)
    print("KERNEL_OK")
</pallas_src>

<mosaic_0001>
module attributes {stable_mosaic.version = 11 : i64} {
  func.func @_fused_kernel(%arg0: i32, %arg1: memref<4x6x256xf32, #tpu.memory_space<vmem>>, %arg2: memref<3x6x256xf32, #tpu.memory_space<vmem>>, %arg3: memref<3xf32, #tpu.memory_space<smem>>, %arg4: memref<8xf32, #tpu.memory_space<smem>>, %arg5: memref<8xf32, #tpu.memory_space<smem>>, %arg6: memref<1x4x2xf32, #tpu.memory_space<vmem>>) attributes {dimension_semantics = [#tpu.dimension_semantics<parallel>], iteration_bounds = array<i64: 1>, scalar_prefetch = 0 : i64, scratch_operands = 0 : i64, tpu.core_type = #tpu.core_type<tc>, window_params = [{transform_indices = @transform_0, window_bounds = array<i64: 4, 6, 256>}, {pipeline_mode = #tpu.pipeline_mode<synchronous>, transform_indices = @transform_1, window_bounds = array<i64: 3, 6, 256>}, {transform_indices = @transform_2, window_bounds = array<i64: 3>}, {transform_indices = @transform_3, window_bounds = array<i64: 8>}, {transform_indices = @transform_4, window_bounds = array<i64: 8>}, {transform_indices = @transform_5, window_bounds = array<i64: 1, 4, 2>}]} {
    %c0 = arith.constant 0 : index
    %c0_0 = arith.constant 0 : index
    %c0_1 = arith.constant 0 : index
    %0 = vector.load %arg1[%c0, %c0_0, %c0_1] : memref<4x6x256xf32, #tpu.memory_space<vmem>>, vector<4x6x256xf32>
    %c0_2 = arith.constant 0 : index
    %c0_3 = arith.constant 0 : index
    %c0_4 = arith.constant 0 : index
    %1 = vector.load %arg2[%c0_2, %c0_3, %c0_4] : memref<3x6x256xf32, #tpu.memory_space<vmem>>, vector<1x6x256xf32>
    %2 = vector.shape_cast %1 : vector<1x6x256xf32> to vector<6x256xf32>
    %3 = vector.shape_cast %2 : vector<6x256xf32> to vector<1x6x256xf32>
    %4 = vector.broadcast %3 : vector<1x6x256xf32> to vector<4x6x256xf32>
    %5 = arith.mulf %0, %4 : vector<4x6x256xf32>
    %cst = arith.constant dense<0.000000e+00> : vector<4x6xf32>
    %6 = vector.multi_reduction <add>, %5, %cst [2] : vector<4x6x256xf32> to vector<4x6xf32>
    %cst_5 = arith.constant dense<0.000000e+00> : vector<4xf32>
    %7 = vector.multi_reduction <add>, %6, %cst_5 [1] : vector<4x6xf32> to vector<4xf32>
    %8 = vector.shape_cast %7 : vector<4xf32> to vector<4x1xf32>
    %c0_6 = arith.constant 0 : index
    %9 = memref.load %arg3[%c0_6] : memref<3xf32, #tpu.memory_space<smem>>
    %10 = vector.broadcast %9 : f32 to vector<4x1xf32>
    %11 = arith.addf %8, %10 : vector<4x1xf32>
    %c1 = arith.constant 1 : index
    %c0_7 = arith.constant 0 : index
    %c0_8 = arith.constant 0 : index
    %12 = vector.load %arg2[%c1, %c0_7, %c0_8] : memref<3x6x256xf32, #tpu.memory_space<vmem>>, vector<1x6x256xf32>
    %13 = vector.shape_cast %12 : vector<1x6x256xf32> to vector<6x256xf32>
    %14 = vector.shape_cast %13 : vector<6x256xf32> to vector<1x6x256xf32>
    %15 = vector.broadcast %14 : vector<1x6x256xf32> to vector<4x6x256xf32>
    %16 = arith.mulf %0, %15 : vector<4x6x256xf32>
    %cst_9 = arith.constant dense<0.000000e+00> : vector<4x6xf32>
    %17 = vector.multi_reduction <add>, %16, %cst_9 [2] : vector<4x6x256xf32> to vector<4x6xf32>
    %cst_10 = arith.constant dense<0.000000e+00> : vector<4xf32>
    %18 = vector.multi_reduction <add>, %17, %cst_10 [1] : vector<4x6xf32> to vector<4xf32>
    %19 = vector.shape_cast %18 : vector<4xf32> to vector<4x1xf32>
    %c1_11 = arith.constant 1 : index
    %20 = memref.load %arg3[%c1_11] : memref<3xf32, #tpu.memory_space<smem>>
    %21 = vector.broadcast %20 : f32 to vector<4x1xf32>
    %22 = arith.addf %19, %21 : vector<4x1xf32>
    %c2 = arith.constant 2 : index
    %c0_12 = arith.constant 0 : index
    %c0_13 = arith.constant 0 : index
    %23 = vector.load %arg2[%c2, %c0_12, %c0_13] : memref<3x6x256xf32, #tpu.memory_space<vmem>>, vector<1x6x256xf32>
    %24 = vector.shape_cast %23 : vector<1x6x256xf32> to vector<6x256xf32>
    %25 = vector.shape_cast %24 : vector<6x256xf32> to vector<1x6x256xf32>
    %26 = vector.broadcast %25 : vector<1x6x256xf32> to vector<4x6x256xf32>
    %27 = arith.mulf %0, %26 : vector<4x6x256xf32>
    %cst_14 = arith.constant dense<0.000000e+00> : vector<4x6xf32>
    %28 = vector.multi_reduction <add>, %27, %cst_14 [2] : vector<4x6x256xf32> to vector<4x6xf32>
    %cst_15 = arith.constant dense<0.000000e+00> : vector<4xf32>
    %29 = vector.multi_reduction <add>, %28, %cst_15 [1] : vector<4x6xf32> to vector<4xf32>
    %30 = vector.shape_cast %29 : vector<4xf32> to vector<4x1xf32>
    %c2_16 = arith.constant 2 : index
    %31 = memref.load %arg3[%c2_16] : memref<3xf32, #tpu.memory_space<smem>>
    %32 = vector.broadcast %31 : f32 to vector<4x1xf32>
    %33 = arith.addf %30, %32 : vector<4x1xf32>
    %c0_17 = arith.constant 0 : index
    %34 = memref.load %arg4[%c0_17] : memref<8xf32, #tpu.memory_space<smem>>
    %35 = vector.broadcast %34 : f32 to vector<4x1xf32>
    %36 = arith.mulf %11, %35 : vector<4x1xf32>
    %c2_18 = arith.constant 2 : index
    %37 = memref.load %arg4[%c2_18] : memref<8xf32, #tpu.memory_space<smem>>
    %38 = vector.broadcast %37 : f32 to vector<4x1xf32>
    %39 = arith.mulf %22, %38 : vector<4x1xf32>
    %40 = arith.addf %36, %39 : vector<4x1xf32>
    %c4 = arith.constant 4 : index
    %41 = memref.load %arg4[%c4] : memref<8xf32, #tpu.memory_space<smem>>
    %42 = vector.broadcast %41 : f32 to vector<4x1xf32>
    %43 = arith.mulf %33, %42 : vector<4x1xf32>
    %44 = arith.addf %40, %43 : vector<4x1xf32>
    %c6 = arith.constant 6 : index
    %45 = memref.load %arg4[%c6] : memref<8xf32, #tpu.memory_space<smem>>
    %46 = vector.broadcast %45 : f32 to vector<4x1xf32>
    %47 = arith.addf %44, %46 : vector<4x1xf32>
    %c1_19 = arith.constant 1 : index
    %48 = memref.load %arg4[%c1_19] : memref<8xf32, #tpu.memory_space<smem>>
    %49 = vector.broadcast %48 : f32 to vector<4x1xf32>
    %50 = arith.mulf %11, %49 : vector<4x1xf32>
    %c3 = arith.constant 3 : index
    %51 = memref.load %arg4[%c3] : memref<8xf32, #tpu.memory_space<smem>>
    %52 = vector.broadcast %51 : f32 to vector<4x1xf32>
    %53 = arith.mulf %22, %52 : vector<4x1xf32>
    %54 = arith.addf %50, %53 : vector<4x1xf32>
    %c5 = arith.constant 5 : index
    %55 = memref.load %arg4[%c5] : memref<8xf32, #tpu.memory_space<smem>>
    %56 = vector.broadcast %55 : f32 to vector<4x1xf32>
    %57 = arith.mulf %33, %56 : vector<4x1xf32>
    %58 = arith.addf %54, %57 : vector<4x1xf32>
    %c7 = arith.constant 7 : index
    %59 = memref.load %arg4[%c7] : memref<8xf32, #tpu.memory_space<smem>>
    %60 = vector.broadcast %59 : f32 to vector<4x1xf32>
    %61 = arith.addf %58, %60 : vector<4x1xf32>
    %62 = arith.maximumf %47, %61 : vector<4x1xf32>
    %63 = arith.subf %47, %62 : vector<4x1xf32>
    %64 = math.exp %63 : vector<4x1xf32>
    %65 = arith.subf %61, %62 : vector<4x1xf32>
    %66 = math.exp %65 : vector<4x1xf32>
    %67 = arith.addf %64, %66 : vector<4x1xf32>
    %68 = arith.divf %66, %67 : vector<4x1xf32>
    %c0_20 = arith.constant 0 : index
    %69 = memref.load %arg5[%c0_20] : memref<8xf32, #tpu.memory_space<smem>>
    %70 = vector.broadcast %69 : f32 to vector<4x1xf32>
    %71 = arith.mulf %11, %70 : vector<4x1xf32>
    %c2_21 = arith.constant 2 : index
    %72 = memref.load %arg5[%c2_21] : memref<8xf32, #tpu.memory_space<smem>>
    %73 = vector.broadcast %72 : f32 to vector<4x1xf32>
    %74 = arith.mulf %22, %73 : vector<4x1xf32>
    %75 = arith.addf %71, %74 : vector<4x1xf32>
    %c4_22 = arith.constant 4 : index
    %76 = memref.load %arg5[%c4_22] : memref<8xf32, #tpu.memory_space<smem>>
    %77 = vector.broadcast %76 : f32 to vector<4x1xf32>
    %78 = arith.mulf %33, %77 : vector<4x1xf32>
    %79 = arith.addf %75, %78 : vector<4x1xf32>
    %c6_23 = arith.constant 6 : index
    %80 = memref.load %arg5[%c6_23] : memref<8xf32, #tpu.memory_space<smem>>
    %81 = vector.broadcast %80 : f32 to vector<4x1xf32>
    %82 = arith.addf %79, %81 : vector<4x1xf32>
    %c1_24 = arith.constant 1 : index
    %83 = memref.load %arg5[%c1_24] : memref<8xf32, #tpu.memory_space<smem>>
    %84 = vector.broadcast %83 : f32 to vector<4x1xf32>
    %85 = arith.mulf %11, %84 : vector<4x1xf32>
    %c3_25 = arith.constant 3 : index
    %86 = memref.load %arg5[%c3_25] : memref<8xf32, #tpu.memory_space<smem>>
    %87 = vector.broadcast %86 : f32 to vector<4x1xf32>
    %88 = arith.mulf %22, %87 : vector<4x1xf32>
    %89 = arith.addf %85, %88 : vector<4x1xf32>
    %c5_26 = arith.constant 5 : index
    %90 = memref.load %arg5[%c5_26] : memref<8xf32, #tpu.memory_space<smem>>
    %91 = vector.broadcast %90 : f32 to vector<4x1xf32>
    %92 = arith.mulf %33, %91 : vector<4x1xf32>
    %93 = arith.addf %89, %92 : vector<4x1xf32>
    %c7_27 = arith.constant 7 : index
    %94 = memref.load %arg5[%c7_27] : memref<8xf32, #tpu.memory_space<smem>>
    %95 = vector.broadcast %94 : f32 to vector<4x1xf32>
    %96 = arith.addf %93, %95 : vector<4x1xf32>
    %97 = arith.maximumf %82, %96 : vector<4x1xf32>
    %98 = arith.subf %82, %97 : vector<4x1xf32>
    %99 = math.exp %98 : vector<4x1xf32>
    %100 = arith.subf %96, %97 : vector<4x1xf32>
    %101 = math.exp %100 : vector<4x1xf32>
    %102 = arith.addf %99, %101 : vector<4x1xf32>
    %103 = arith.divf %101, %102 : vector<4x1xf32>
    %104 = tpu.concatenate %68, %103 in 1 : vector<4x1xf32>, vector<4x1xf32> -> vector<4x2xf32>
    %c0_28 = arith.constant 0 : index
    %c0_29 = arith.constant 0 : index
    %c0_30 = arith.constant 0 : index
    %105 = vector.load %arg6[%c0_28, %c0_29, %c0_30] : memref<1x4x2xf32, #tpu.memory_space<vmem>>, vector<1x4x2xf32>
    %106 = vector.shape_cast %105 : vector<1x4x2xf32> to vector<4x2xf32>
    %107 = vector.shape_cast %104 : vector<4x2xf32> to vector<1x4x2xf32>
    tpu.vector_store %arg6[%c0_28, %c0_29, %c0_30], %107 {strides = array<i32>} : memref<1x4x2xf32, #tpu.memory_space<vmem>>, vector<1x4x2xf32>,
    return
  }
  func.func @transform_0(%arg0: i32) -> (i32, i32, i32) {
    %c0_i32 = arith.constant 0 : i32
    %c0_i32_0 = arith.constant 0 : i32
    %c0_i32_1 = arith.constant 0 : i32
    return %arg0, %c0_i32, %c0_i32_0 : i32, i32, i32
  }
  func.func @transform_1(%arg0: i32) -> (i32, i32, i32) {
    %c0_i32 = arith.constant 0 : i32
    %c0_i32_0 = arith.constant 0 : i32
    %c0_i32_1 = arith.constant 0 : i32
    %c0_i32_2 = arith.constant 0 : i32
    return %c0_i32, %c0_i32_0, %c0_i32_1 : i32, i32, i32
  }
  func.func @transform_2(%arg0: i32) -> i32 {
    %c0_i32 = arith.constant 0 : i32
    %c0_i32_0 = arith.constant 0 : i32
    return %c0_i32 : i32
  }
  func.func @transform_3(%arg0: i32) -> i32 {
    %c0_i32 = arith.constant 0 : i32
    %c0_i32_0 = arith.constant 0 : i32
    return %c0_i32 : i32
  }
  func.func @transform_4(%arg0: i32) -> i32 {
    %c0_i32 = arith.constant 0 : i32
    %c0_i32_0 = arith.constant 0 : i32
    return %c0_i32 : i32
  }
  func.func @transform_5(%arg0: i32) -> (i32, i32, i32) {
    %c0_i32 = arith.constant 0 : i32
    %c0_i32_0 = arith.constant 0 : i32
    %c0_i32_1 = arith.constant 0 : i32
    return %arg0, %c0_i32, %c0_i32_0 : i32, i32, i32
  }
}

</mosaic_0001>

<llo_original>
// kernel: tpu_custom_call.1
$region0: #{tpu_custom_call.1}
  #allocation0 [shape = 'u32[]', space=smem, size = 0x4, offset = 0x4, fixed_abs, tag = 'smem constant byte address 0x4 - core index']
  #allocation1 [shape = 'u32[144,128]{1,0:T(1,128)}', space=vmem, size = 0x12000, scoped, tag = 'internal scratch']
  %s0 = inlined_call_operand.vmem [shape: f32[4,6,256], index: 0, kind: input, shape index: {}]
  %s1 = inlined_call_operand.vmem [shape: f32[3,6,256], index: 1, kind: input, shape index: {}]
  %s2 = inlined_call_operand.vmem [shape: f32[3], index: 2, kind: input, shape index: {}]
  %s3 = inlined_call_operand.vmem [shape: f32[8], index: 3, kind: input, shape index: {}]
  %s4 = inlined_call_operand.vmem [shape: f32[8], index: 4, kind: input, shape index: {}]
  %s5 = inlined_call_operand.vmem [shape: f32[1,4,2], index: 5, kind: output, shape index: {}]
  %s6 = sld [smem:[#allocation0]]
  $region42: #{tpu_custom_call.1} parent=0
    _
  %s8 = ssub.s32 1, %s6
  %s9 = scalar_select 0, %s8, %s6
  $region1: #{tpu_custom_call.1} parent=0
    #allocation2 [shape = 'u8[512]{0}', space=smem, size = 0x200, scoped, tag = 'input window, operand 2, single buffered']
    #allocation3 [shape = 's32[1]{0}', space=sflag, size = 0x4, scoped, tag = 'scoped memory for tpu_custom_call.1']
    #allocation4 [shape = 'u8[512]{0}', space=smem, size = 0x200, scoped, tag = 'input window, operand 3, single buffered']
    #allocation5 [shape = 's32[1]{0}', space=sflag, size = 0x4, scoped, tag = 'scoped memory for tpu_custom_call.1']
    #allocation6 [shape = 'u8[512]{0}', space=smem, size = 0x200, scoped, tag = 'input window, operand 4, single buffered']
    %10 = vsyncpa [#allocation3], 0
    %11 = vsyncpa [#allocation5], 0
    // Predicated region
    $region2: #{tpu_custom_call.1} parent=1 // pred_check
      _
    $region3: #{tpu_custom_call.1} parent=1 // pred_check_branch
      %13 = sbr.rel (0) target = $region5
    $region4: #{tpu_custom_call.1} parent=1 // pred_region
      _
    $region5: #{tpu_custom_call.1} parent=1 // pred_fallthru
      _
    // Predicated region
    $region6: #{tpu_custom_call.1} parent=1 // pred_check
      _
    $region7: #{tpu_custom_call.1} parent=1 // pred_check_branch
      %15 = sbr.rel (0) target = $region9
    $region8: #{tpu_custom_call.1} parent=1 // pred_region
      _
    $region9: #{tpu_custom_call.1} parent=1 // pred_fallthru
      _
    // Predicated region
    $region10: #{tpu_custom_call.1} parent=1 // pred_check
      _
    $region11: #{tpu_custom_call.1} parent=1 // pred_check_branch
      %17 = sbr.rel (0) target = $region13
    $region12: #{tpu_custom_call.1} parent=1 // pred_region
      %s19 = ssub.s32 16, 16
      %20 = vsyncadd [#allocation3], %s19
      %s22 = sshll.u32 %s2, 4
      %s23 = int_to_ptr.vmem [resolvable:$true] %s22
      %25 = dma.vmem_to_smem %s23, 16, [#allocation2], [#allocation3]
    $region13: #{tpu_custom_call.1} parent=1 // pred_fallthru
      _
    // Predicated region
    $region14: #{tpu_custom_call.1} parent=1 // pred_check
      _
    $region15: #{tpu_custom_call.1} parent=1 // pred_check_branch
      %27 = sbr.rel (0) target = $region17
    $region16: #{tpu_custom_call.1} parent=1 // pred_region
      %s29 = ssub.s32 16, 16
      %30 = vsyncadd [#allocation5], %s29
      %s32 = sshll.u32 %s3, 4
      %s33 = int_to_ptr.vmem [resolvable:$true] %s32
      %35 = dma.vmem_to_smem %s33, 16, [#allocation4], [#allocation5]
    $region17: #{tpu_custom_call.1} parent=1 // pred_fallthru
      _
    // Predicated region
    $region18: #{tpu_custom_call.1} parent=1 // pred_check
      _
    $region19: #{tpu_custom_call.1} parent=1 // pred_check_branch
      %37 = sbr.rel (0) target = $region21
    $region20: #{tpu_custom_call.1} parent=1 // pred_region
      %s39 = ssub.s32 16, 16
      %40 = vsyncadd [#allocation5], %s39
      %s42 = sshll.u32 %s4, 4
      %s43 = int_to_ptr.vmem [resolvable:$true] %s42
      %45 = dma.vmem_to_smem %s43, 16, [#allocation6], [#allocation5]
    $region21: #{tpu_custom_call.1} parent=1 // pred_fallthru
      _
    // Predicated region
    $region22: #{tpu_custom_call.1} parent=1 // pred_check
      _
    $region23: #{tpu_custom_call.1} parent=1 // pred_check_branch
      %47 = sbr.rel (0) target = $region25
    $region24: #{tpu_custom_call.1} parent=1 // pred_region
      %48 = dma.done [#allocation3], 16
    $region25: #{tpu_custom_call.1} parent=1 // pred_fallthru
      _
    // Predicated region
    $region26: #{tpu_custom_call.1} parent=1 // pred_check
      _
    $region27: #{tpu_custom_call.1} parent=1 // pred_check_branch
      %50 = sbr.rel (0) target = $region29
    $region28: #{tpu_custom_call.1} parent=1 // pred_region
      %51 = dma.done [#allocation5], 16
    $region29: #{tpu_custom_call.1} parent=1 // pred_fallthru
      _
    // Predicated region
    $region30: #{tpu_custom_call.1} parent=1 // pred_check
      _
    $region31: #{tpu_custom_call.1} parent=1 // pred_check_branch
      %53 = sbr.rel (0) target = $region33
    $region32: #{tpu_custom_call.1} parent=1 // pred_region
      %54 = dma.done [#allocation5], 16
    $region33: #{tpu_custom_call.1} parent=1 // pred_fallthru
      _
    %55 = sfence
    %v56 = vld [vmem:[%s0] sm:$0x3f]
    %v57 = vld [vmem:[%s0 + $0x8] sm:$0x3f]
    %v58 = vld [vmem:[%s0 + $0x10] sm:$0x3f]
    %v59 = vld [vmem:[%s0 + $0x18] sm:$0x3f]
    %v60 = vld [vmem:[%s0 + $0x20] sm:$0x3f]
    %v61 = vld [vmem:[%s0 + $0x28] sm:$0x3f]
    %v62 = vld [vmem:[%s0 + $0x30] sm:$0x3f]
    %v63 = vld [vmem:[%s0 + $0x38] sm:$0x3f]
    %v64 = vld [vmem:[%s1] sm:$0x3f]
    %v65 = vld [vmem:[%s1 + $0x8] sm:$0x3f]
    %v66 = vmul.f32 %v56, %v64
    %v67 = vmul.f32 %v57, %v65
    %v68 = vmul.f32 %v58, %v64
    %v69 = vmul.f32 %v59, %v65
    %v70 = vmul.f32 %v60, %v64
    %v71 = vmul.f32 %v61, %v65
    %v72 = vmul.f32 %v62, %v64
    %v73 = vmul.f32 %v63, %v65
    %vm74 = vcmask 1045504
    %v75 = vsel %vm74, %v66, 0.0
    %v76 = vsel %vm74, %v67, 0.0
    %v77 = vadd.f32 %v75, %v76
    %78 = vadd.xlane.f32.xlu0 %v77
    %v79 = vpop.xlane.xlu0 %78
    %v80 = vsel %vm74, %v68, 0.0
    %v81 = vsel %vm74, %v69, 0.0
    %v82 = vadd.f32 %v80, %v81
    %83 = vadd.xlane.f32.xlu0 %v82
    %v84 = vpop.xlane.xlu0 %83
    %v85 = vsel %vm74, %v70, 0.0
    %v86 = vsel %vm74, %v71, 0.0
    %v87 = vadd.f32 %v85, %v86
    %88 = vadd.xlane.f32.xlu0 %v87
    %v89 = vpop.xlane.xlu0 %88
    %v90 = vsel %vm74, %v72, 0.0
    %v91 = vsel %vm74, %v73, 0.0
    %v92 = vadd.f32 %v90, %v91
    %93 = vadd.xlane.f32.xlu0 %v92
    %v94 = vpop.xlane.xlu0 %93
    %v99 = vlaneseq
    %v100 = vand.u32 %v99, 127
    %v101 = vlaneseq
    %v102 = vshrl.u32 %v101, 7
    %v103 = vsub.s32 %v100, %v102
    %v104 = vrot.slane %v79, %v103
    %v105 = vlaneseq
    %v106 = vshrl.u32 %v105, 7
    %v107 = vsub.s32 %v100, %v106
    %v108 = vrot.slane %v84, %v107
    %v109 = vlaneseq
    %v110 = vshrl.u32 %v109, 7
    %v111 = vsub.s32 %v100, %v110
    %v112 = vrot.slane %v89, %v111
    %v113 = vlaneseq
    %v114 = vshrl.u32 %v113, 7
    %v115 = vsub.s32 %v100, %v114
    %v116 = vrot.slane %v94, %v115
    %vm117 = vcmask 1041409
    %v118 = vsel %vm117, %v108, %v104
    %vm119 = vcmask 1042434
    %v120 = vsel %vm119, %v112, %v118
    %vm121 = vcmask 1043459
    %v122 = vsel %vm121, %v116, %v120
    %vm124 = vcmask 44032
    %v125 = vsel %vm124, %v122, 0.0
    %126 = vadd.xlane.f32.xlu0 %v125
    %v127 = vpop.xlane.xlu0 %126
    %s128 = sld [smem:[#allocation2]]
    %v129 = vstv %s128
    %v130 = vadd.f32 %v127, %v129
    %s131 = scalar_lea.vmem %s1, 16
    %v132 = vld [vmem:[%s131] sm:$0x3f]
    %v133 = vld [vmem:[%s131 + $0x8] sm:$0x3f]
    %v134 = vmul.f32 %v56, %v132
    %v135 = vmul.f32 %v57, %v133
    %v136 = vmul.f32 %v58, %v132
    %v137 = vmul.f32 %v59, %v133
    %v138 = vmul.f32 %v60, %v132
    %v139 = vmul.f32 %v61, %v133
    %v140 = vmul.f32 %v62, %v132
    %v141 = vmul.f32 %v63, %v133
    %v142 = vsel %vm74, %v134, 0.0
    %v143 = vsel %vm74, %v135, 0.0
    %v144 = vadd.f32 %v142, %v143
    %145 = vadd.xlane.f32.xlu0 %v144
    %v146 = vpop.xlane.xlu0 %145
    %v147 = vsel %vm74, %v136, 0.0
    %v148 = vsel %vm74, %v137, 0.0
    %v149 = vadd.f32 %v147, %v148
    %150 = vadd.xlane.f32.xlu0 %v149
    %v151 = vpop.xlane.xlu0 %150
    %v152 = vsel %vm74, %v138, 0.0
    %v153 = vsel %vm74, %v139, 0.0
    %v154 = vadd.f32 %v152, %v153
    %155 = vadd.xlane.f32.xlu0 %v154
    %v156 = vpop.xlane.xlu0 %155
    %v157 = vsel %vm74, %v140, 0.0
    %v158 = vsel %vm74, %v141, 0.0
    %v159 = vadd.f32 %v157, %v158
    %160 = vadd.xlane.f32.xlu0 %v159
    %v161 = vpop.xlane.xlu0 %160
    %v166 = vlaneseq
    %v167 = vshrl.u32 %v166, 7
    %v168 = vsub.s32 %v100, %v167
    %v169 = vrot.slane %v146, %v168
    %v170 = vlaneseq
    %v171 = vshrl.u32 %v170, 7
    %v172 = vsub.s32 %v100, %v171
    %v173 = vrot.slane %v151, %v172
    %v174 = vlaneseq
    %v175 = vshrl.u32 %v174, 7
    %v176 = vsub.s32 %v100, %v175
    %v177 = vrot.slane %v156, %v176
    %v178 = vlaneseq
    %v179 = vshrl.u32 %v178, 7
    %v180 = vsub.s32 %v100, %v179
    %v181 = vrot.slane %v161, %v180
    %v182 = vsel %vm117, %v173, %v169
    %v183 = vsel %vm119, %v177, %v182
    %v184 = vsel %vm121, %v181, %v183
    %v186 = vsel %vm124, %v184, 0.0
    %187 = vadd.xlane.f32.xlu0 %v186
    %v188 = vpop.xlane.xlu0 %187
    %s189 = sld [smem:[#allocation2 + $0x1]]
    %v190 = vstv %s189
    %v191 = vadd.f32 %v188, %v190
    %s192 = scalar_lea.vmem %s1, 32
    %v193 = vld [vmem:[%s192] sm:$0x3f]
    %v194 = vld [vmem:[%s192 + $0x8] sm:$0x3f]
    %v195 = vmul.f32 %v56, %v193
    %v196 = vmul.f32 %v57, %v194
    %v197 = vmul.f32 %v58, %v193
    %v198 = vmul.f32 %v59, %v194
    %v199 = vmul.f32 %v60, %v193
    %v200 = vmul.f32 %v61, %v194
    %v201 = vmul.f32 %v62, %v193
    %v202 = vmul.f32 %v63, %v194
    %v203 = vsel %vm74, %v195, 0.0
    %v204 = vsel %vm74, %v196, 0.0
    %v205 = vadd.f32 %v203, %v204
    %206 = vadd.xlane.f32.xlu0 %v205
    %v207 = vpop.xlane.xlu0 %206
    %v208 = vsel %vm74, %v197, 0.0
    %v209 = vsel %vm74, %v198, 0.0
    %v210 = vadd.f32 %v208, %v209
    %211 = vadd.xlane.f32.xlu0 %v210
    %v212 = vpop.xlane.xlu0 %211
    %v213 = vsel %vm74, %v199, 0.0
    %v214 = vsel %vm74, %v200, 0.0
    %v215 = vadd.f32 %v213, %v214
    %216 = vadd.xlane.f32.xlu0 %v215
    %v217 = vpop.xlane.xlu0 %216
    %v218 = vsel %vm74, %v201, 0.0
    %v219 = vsel %vm74, %v202, 0.0
    %v220 = vadd.f32 %v218, %v219
    %221 = vadd.xlane.f32.xlu0 %v220
    %v222 = vpop.xlane.xlu0 %221
    %v227 = vlaneseq
    %v228 = vshrl.u32 %v227, 7
    %v229 = vsub.s32 %v100, %v228
    %v230 = vrot.slane %v207, %v229
    %v231 = vlaneseq
    %v232 = vshrl.u32 %v231, 7
    %v233 = vsub.s32 %v100, %v232
    %v234 = vrot.slane %v212, %v233
    %v235 = vlaneseq
    %v236 = vshrl.u32 %v235, 7
    %v237 = vsub.s32 %v100, %v236
    %v238 = vrot.slane %v217, %v237
    %v239 = vlaneseq
    %v240 = vshrl.u32 %v239, 7
    %v241 = vsub.s32 %v100, %v240
    %v242 = vrot.slane %v222, %v241
    %v243 = vsel %vm117, %v234, %v230
    %v244 = vsel %vm119, %v238, %v243
    %v245 = vsel %vm121, %v242, %v244
    %v247 = vsel %vm124, %v245, 0.0
    %248 = vadd.xlane.f32.xlu0 %v247
    %v249 = vpop.xlane.xlu0 %248
    %s250 = sld [smem:[#allocation2 + $0x2]]
    %v251 = vstv %s250
    %v252 = vadd.f32 %v249, %v251
    %s253 = sld [smem:[#allocation4]]
    %v254 = vstv %s253
    %v255 = vmul.f32 %v130, %v254
    %s256 = sld [smem:[#allocation4 + $0x2]]
    %v257 = vstv %s256
    %v258 = vmul.f32 %v191, %v257
    %v259 = vadd.f32 %v255, %v258
    %s260 = sld [smem:[#allocation4 + $0x4]]
    %v261 = vstv %s260
    %v262 = vmul.f32 %v252, %v261
    %v263 = vadd.f32 %v259, %v262
    %s264 = sld [smem:[#allocation4 + $0x6]]
    %v265 = vstv %s264
    %v266 = vadd.f32 %v263, %v265
    %s267 = sld [smem:[#allocation4 + $0x1]]
    %v268 = vstv %s267
    %v269 = vmul.f32 %v130, %v268
    %s270 = sld [smem:[#allocation4 + $0x3]]
    %v271 = vstv %s270
    %v272 = vmul.f32 %v191, %v271
    %v273 = vadd.f32 %v269, %v272
    %s274 = sld [smem:[#allocation4 + $0x5]]
    %v275 = vstv %s274
    %v276 = vmul.f32 %v252, %v275
    %v277 = vadd.f32 %v273, %v276
    %s278 = sld [smem:[#allocation4 + $0x7]]
    %v279 = vstv %s278
    %v280 = vadd.f32 %v277, %v279
    %v281 = vmax.f32 %v266, %v280
    %v282 = vsub.f32 %v266, %v281
    %v283 = vmul.f32 %v282, 1.442695
    %v284 = vpow.pop %v283
    %v285 = vsub.f32 %v280, %v281
    %v286 = vmul.f32 %v285, 1.442695
    %v287 = vpow.pop %v286
    %v288 = vadd.f32 %v284, %v287
    %v289 = vrcp.pop %v288
    %v290 = vmul.f32 %v287, %v289
    %s291 = sld [smem:[#allocation6]]
    %v292 = vstv %s291
    %v293 = vmul.f32 %v130, %v292
    %s294 = sld [smem:[#allocation6 + $0x2]]
    %v295 = vstv %s294
    %v296 = vmul.f32 %v191, %v295
    %v297 = vadd.f32 %v293, %v296
    %s298 = sld [smem:[#allocation6 + $0x4]]
    %v299 = vstv %s298
    %v300 = vmul.f32 %v252, %v299
    %v301 = vadd.f32 %v297, %v300
    %s302 = sld [smem:[#allocation6 + $0x6]]
    %v303 = vstv %s302
    %v304 = vadd.f32 %v301, %v303
    %s305 = sld [smem:[#allocation6 + $0x1]]
    %v306 = vstv %s305
    %v307 = vmul.f32 %v130, %v306
    %s308 = sld [smem:[#allocation6 + $0x3]]
    %v309 = vstv %s308
    %v310 = vmul.f32 %v191, %v309
    %v311 = vadd.f32 %v307, %v310
    %s312 = sld [smem:[#allocation6 + $0x5]]
    %v313 = vstv %s312
    %v314 = vmul.f32 %v252, %v313
    %v315 = vadd.f32 %v311, %v314
    %s316 = sld [smem:[#allocation6 + $0x7]]
    %v317 = vstv %s316
    %v318 = vadd.f32 %v315, %v317
    %v319 = vmax.f32 %v304, %v318
    %v320 = vsub.f32 %v304, %v319
    %v321 = vmul.f32 %v320, 1.442695
    %v322 = vpow.pop %v321
    %v323 = vsub.f32 %v318, %v319
    %v324 = vmul.f32 %v323, 1.442695
    %v325 = vpow.pop %v324
    %v326 = vadd.f32 %v322, %v325
    %v327 = vrcp.pop %v326
    %v328 = vmul.f32 %v325, %v327
    %vm329 = vcmask 7168
    %v330 = vsel %vm329, %v290, %v328
    %vm331 = vcmask 11264
    %332 = vst.msk [vmem:[%s5] sm:$0xf] %vm331, %v330
    // Predicated region
    $region34: #{tpu_custom_call.1} parent=1 // pred_check
      _
    $region35: #{tpu_custom_call.1} parent=1 // pred_check_branch
      %334 = sbr.rel (0) target = $region37
    $region36: #{tpu_custom_call.1} parent=1 // pred_region
      _
    $region37: #{tpu_custom_call.1} parent=1 // pred_fallthru
      _
    // Predicated region
    $region38: #{tpu_custom_call.1} parent=1 // pred_check
      _
    $region39: #{tpu_custom_call.1} parent=1 // pred_check_branch
      %336 = sbr.rel (0) target = $region41
    $region40: #{tpu_custom_call.1} parent=1 // pred_region
      _
    $region41: #{tpu_custom_call.1} parent=1 // pred_fallthru
      _
    %337 = vsyncpa [#allocation3], 1
    %338 = vsyncpa [#allocation5], 1

</llo_original>
